<compile_context>
chip_gen: v5e
topology: v5e:2x2
jax: 0.10.0
libtpu: 0.0.40
codegen_flags: <defaults>
</compile_context>

<pallas_src>
import jax
import jax.numpy as jnp
from jax import lax
from jax.experimental import pallas as pl
from jax.experimental.pallas import tpu as pltpu

_LANE = 128          # lane width: batch tile must be a multiple of this
_MAX_B_TILE = 512    # cap so the fully-unrolled chain stays far from vreg spills


def _round_up(x, m):
    return ((x + m - 1) // m) * m


def _choose_b_tile(batch):
    b_pad = _round_up(max(batch, _LANE), _LANE)
    if b_pad <= _LANE:
        return _LANE
    # Prefer >= 2 grid steps (v7x dual TensorCore) while capping the tile size.
    half = (b_pad // 2 // _LANE) * _LANE
    return max(_LANE, min(_MAX_B_TILE, half))


def _rnn_kernel(ids_ref, ptab_ref, whh_ref, wlin_ref, blin_ref, out_ref):
    """Embedding-projection gather + tanh RNN + final linear for one batch tile.

    ids_ref  : (S, Bt)   int32 token ids, time-major, batch on lanes
    ptab_ref : (H, Vp)   proj table = (emb @ W_ih^T + b_ih + b_hh)^T, V padded
    whh_ref  : (H, H)    hidden->hidden weight (column-vector convention)
    wlin_ref : (H, 1)    final linear weight as a column
    blin_ref : (1, 1)    final linear bias
    out_ref  : (1, Bt)   lane-dense output row
    """
    S, Bt = ids_ref.shape
    H, Vp = ptab_ref.shape
    ptab = ptab_ref[...]
    whh = whh_ref[...]
    # Hoisted out of the loop: constant across time steps (JAX does not CSE it).
    iota_v = lax.broadcasted_iota(jnp.int32, (Vp, Bt), 0)

    def step(t, h):
        # Gather-as-matmul: one-hot (Vp, Bt) built on the VPU, projected on the
        # MXU. Independent of h, so it overlaps the serial tanh chain.
        ids_t = ids_ref[pl.ds(t, 1), :]                        # (1, Bt)
        onehot = (iota_v == ids_t).astype(jnp.float32)         # (Vp, Bt)
        xproj = jnp.dot(ptab, onehot,
                        preferred_element_type=jnp.float32)    # (H, Bt)
        # Only this matmul (wide N = Bt) + tanh sits on the serial path.
        return jnp.tanh(xproj + jnp.dot(whh, h,
                                        preferred_element_type=jnp.float32))

    h0 = jnp.zeros((H, Bt), jnp.float32)
    h_last = lax.fori_loop(0, S, step, h0, unroll=True)

    # Final Linear(H -> 1): VPU multiply + sublane reduce -> lane-dense row.
    out_ref[...] = (jnp.sum(h_last * wlin_ref[...], axis=0, keepdims=True)
                    + blin_ref[...])


def judge_exists_char_forward(x, params, y=None):
    """x: (B, S) int token ids. Returns (B, 1) predictions, or scalar MSE if y given."""
    emb_table = params["embedding"]          # (V, D), row 0 zeros (padding_idx=0)
    w_ih = params["w_ih"]                    # (H, D)
    w_hh = params["w_hh"]                    # (H, H)
    b_ih = params["b_ih"]                    # (H,)
    b_hh = params["b_hh"]                    # (H,)
    w_lin = params["w_lin"]                  # (1, H)
    b_lin = params["b_lin"]                  # (1,)

    B, S = x.shape
    H = w_hh.shape[0]
    V = emb_table.shape[0]

    # ---- Tiny JAX glue: fold embedding + input projection + both biases ----
    # proj_table[:, v] = W_ih @ emb[v] + b_ih + b_hh           shape (H, V)
    proj_table = (jnp.dot(emb_table, w_ih.T,
                          preferred_element_type=jnp.float32) + (b_ih + b_hh)).T
    v_pad = _round_up(V, 8)
    if v_pad != V:
        proj_table = jnp.pad(proj_table, ((0, 0), (0, v_pad - V)))

    # Batch on lanes: time-major ids (S, B_pad), batch padded to the tile size.
    b_tile = _choose_b_tile(B)
    b_padded = _round_up(max(B, b_tile), b_tile)
    ids = x.astype(jnp.int32).T                               # (S, B)
    if b_padded != B:
        ids = jnp.pad(ids, ((0, 0), (0, b_padded - B)))       # pad with token 0

    whh = w_hh.astype(jnp.float32)                            # (H, H)
    wlin_col = w_lin.reshape(H, 1).astype(jnp.float32)        # (H, 1)
    blin = b_lin.reshape(1, 1).astype(jnp.float32)            # (1, 1)

    n_tiles = b_padded // b_tile
    out = pl.pallas_call(
        _rnn_kernel,
        out_shape=jax.ShapeDtypeStruct((1, b_padded), jnp.float32),
        grid=(n_tiles,),
        in_specs=[
            pl.BlockSpec((S, b_tile), lambda i: (0, i)),       # ids (lane-tiled)
            pl.BlockSpec((H, v_pad), lambda i: (0, 0)),        # proj table
            pl.BlockSpec((H, H), lambda i: (0, 0)),            # W_hh
            pl.BlockSpec((H, 1), lambda i: (0, 0)),            # W_lin column
            pl.BlockSpec((1, 1), lambda i: (0, 0)),            # b_lin
        ],
        out_specs=pl.BlockSpec((1, b_tile), lambda i: (0, i)),  # lane-dense out
        compiler_params=pltpu.CompilerParams(
            dimension_semantics=("parallel",)),
    )(ids, proj_table, whh, wlin_col, blin)

    y_pred = out[0, :B].reshape(B, 1)

    if y is not None:
        # Loss is tiny glue; padded rows are already sliced off.
        return jnp.mean((y_pred - y) ** 2)
    return y_pred


def init_params(key, vocabsize, char_dim, sentence_length):
    """Deterministic parameter init matching the PyTorch module's shapes."""
    H = sentence_length
    k_emb, k_wih, k_whh, k_bih, k_bhh, k_wl, k_bl = jax.random.split(key, 7)
    stdv = 1.0 / jnp.sqrt(H)
    emb = jax.random.normal(k_emb, (vocabsize, char_dim), jnp.float32)
    emb = emb.at[0].set(0.0)  # padding_idx=0
    params = {
        "embedding": emb,
        "w_ih": jax.random.uniform(k_wih, (H, char_dim), jnp.float32, -stdv, stdv),
        "w_hh": jax.random.uniform(k_whh, (H, H), jnp.float32, -stdv, stdv),
        "b_ih": jax.random.uniform(k_bih, (H,), jnp.float32, -stdv, stdv),
        "b_hh": jax.random.uniform(k_bhh, (H,), jnp.float32, -stdv, stdv),
        "w_lin": jax.random.uniform(k_wl, (1, H), jnp.float32, -stdv, stdv),
        "b_lin": jax.random.uniform(k_bl, (1,), jnp.float32, -stdv, stdv),
    }
    return params


if __name__ == "__main__":
    vocabsize, char_dim, sentence_length = 30, 32, 8
    batch = 2

    key = jax.random.PRNGKey(0)
    k_params, k_x = jax.random.split(key)
    params = init_params(k_params, vocabsize, char_dim, sentence_length)

    x = jax.random.randint(k_x, (batch, sentence_length), 0, vocabsize, jnp.int32)

    y_pred = judge_exists_char_forward(x, params)
    jax.block_until_ready(y_pred)
    assert y_pred.shape == (batch, 1)

    # Pure-JAX reference check of the full forward (same math, no Pallas).
    emb_x = jnp.take(params["embedding"], x, axis=0)
    h = jnp.zeros((batch, sentence_length), jnp.float32)
    for t in range(sentence_length):
        h = jnp.tanh(emb_x[:, t, :] @ params["w_ih"].T + params["b_ih"]
                     + h @ params["w_hh"].T + params["b_hh"])
    y_ref = h @ params["w_lin"].T + params["b_lin"]
    assert jnp.allclose(y_pred, y_ref, atol=1e-5), "mismatch vs JAX reference"

    # Also exercise the loss branch (forward with y).
    y_true = jnp.zeros((batch, 1), jnp.float32)
    loss = judge_exists_char_forward(x, params, y_true)
    jax.block_until_ready(loss)

    print("KERNEL_OK")
</pallas_src>

<mosaic_0001>
module attributes {stable_mosaic.version = 11 : i64} {
  func.func @_rnn_kernel(%arg0: i32, %arg1: memref<8x128xi32, #tpu.memory_space<vmem>>, %arg2: memref<8x32xf32, #tpu.memory_space<vmem>>, %arg3: memref<8x8xf32, #tpu.memory_space<vmem>>, %arg4: memref<8x1xf32, #tpu.memory_space<vmem>>, %arg5: memref<1x1xf32, #tpu.memory_space<vmem>>, %arg6: memref<1x128xf32, #tpu.memory_space<vmem>>) attributes {dimension_semantics = [#tpu.dimension_semantics<parallel>], iteration_bounds = array<i64: 1>, scalar_prefetch = 0 : i64, scratch_operands = 0 : i64, tpu.core_type = #tpu.core_type<tc>, window_params = [{transform_indices = @transform_0, window_bounds = array<i64: 8, 128>}, {pipeline_mode = #tpu.pipeline_mode<synchronous>, transform_indices = @transform_1, window_bounds = array<i64: 8, 32>}, {pipeline_mode = #tpu.pipeline_mode<synchronous>, transform_indices = @transform_2, window_bounds = array<i64: 8, 8>}, {pipeline_mode = #tpu.pipeline_mode<synchronous>, transform_indices = @transform_3, window_bounds = array<i64: 8, 1>}, {pipeline_mode = #tpu.pipeline_mode<synchronous>, transform_indices = @transform_4, window_bounds = array<i64: 1, 1>}, {transform_indices = @transform_5, window_bounds = array<i64: 1, 128>}]} {
    %c0 = arith.constant 0 : index
    %c0_0 = arith.constant 0 : index
    %0 = vector.load %arg2[%c0, %c0_0] : memref<8x32xf32, #tpu.memory_space<vmem>>, vector<8x32xf32>
    %c0_1 = arith.constant 0 : index
    %c0_2 = arith.constant 0 : index
    %1 = vector.load %arg3[%c0_1, %c0_2] : memref<8x8xf32, #tpu.memory_space<vmem>>, vector<8x8xf32>
    %2 = tpu.iota {dimensions = array<i32: 0>} : vector<32x128xi32>
    %cst = arith.constant 0.000000e+00 : f32
    %3 = vector.broadcast %cst : f32 to vector<8x128xf32>
    %c0_i32 = arith.constant 0 : i32
    %4 = arith.index_cast %c0_i32 : i32 to index
    %c0_3 = arith.constant 0 : index
    %5 = vector.load %arg1[%4, %c0_3] : memref<8x128xi32, #tpu.memory_space<vmem>>, vector<1x128xi32>
    %6 = vector.broadcast %5 : vector<1x128xi32> to vector<32x128xi32>
    %7 = arith.cmpi eq, %2, %6 : vector<32x128xi32>
    %8 = arith.extui %7 : vector<32x128xi1> to vector<32x128xi32>
    %9 = arith.sitofp %8 : vector<32x128xi32> to vector<32x128xf32>
    %cst_4 = arith.constant dense<0.000000e+00> : vector<8x128xf32>
    %10 = tpu.matmul %0, %9, %cst_4 {dimension_numbers = #tpu.dot_dimension_numbers<[1], [0], [0], [1], [0, 0, 1, 1], [], []>} : vector<8x32xf32>, vector<32x128xf32>, vector<8x128xf32> -> vector<8x128xf32>
    %cst_5 = arith.constant dense<0.000000e+00> : vector<8x128xf32>
    %11 = tpu.matmul %1, %3, %cst_5 {dimension_numbers = #tpu.dot_dimension_numbers<[1], [0], [0], [1], [0, 0, 1, 1], [], []>} : vector<8x8xf32>, vector<8x128xf32>, vector<8x128xf32> -> vector<8x128xf32>
    %12 = arith.addf %10, %11 : vector<8x128xf32>
    %13 = math.tanh %12 : vector<8x128xf32>
    %c1_i32 = arith.constant 1 : i32
    %14 = arith.index_cast %c1_i32 : i32 to index
    %c0_6 = arith.constant 0 : index
    %15 = vector.load %arg1[%14, %c0_6] : memref<8x128xi32, #tpu.memory_space<vmem>>, vector<1x128xi32>
    %16 = vector.broadcast %15 : vector<1x128xi32> to vector<32x128xi32>
    %17 = arith.cmpi eq, %2, %16 : vector<32x128xi32>
    %18 = arith.extui %17 : vector<32x128xi1> to vector<32x128xi32>
    %19 = arith.sitofp %18 : vector<32x128xi32> to vector<32x128xf32>
    %cst_7 = arith.constant dense<0.000000e+00> : vector<8x128xf32>
    %20 = tpu.matmul %0, %19, %cst_7 {dimension_numbers = #tpu.dot_dimension_numbers<[1], [0], [0], [1], [0, 0, 1, 1], [], []>} : vector<8x32xf32>, vector<32x128xf32>, vector<8x128xf32> -> vector<8x128xf32>
    %cst_8 = arith.constant dense<0.000000e+00> : vector<8x128xf32>
    %21 = tpu.matmul %1, %13, %cst_8 {dimension_numbers = #tpu.dot_dimension_numbers<[1], [0], [0], [1], [0, 0, 1, 1], [], []>} : vector<8x8xf32>, vector<8x128xf32>, vector<8x128xf32> -> vector<8x128xf32>
    %22 = arith.addf %20, %21 : vector<8x128xf32>
    %23 = math.tanh %22 : vector<8x128xf32>
    %c2_i32 = arith.constant 2 : i32
    %24 = arith.index_cast %c2_i32 : i32 to index
    %c0_9 = arith.constant 0 : index
    %25 = vector.load %arg1[%24, %c0_9] : memref<8x128xi32, #tpu.memory_space<vmem>>, vector<1x128xi32>
    %26 = vector.broadcast %25 : vector<1x128xi32> to vector<32x128xi32>
    %27 = arith.cmpi eq, %2, %26 : vector<32x128xi32>
    %28 = arith.extui %27 : vector<32x128xi1> to vector<32x128xi32>
    %29 = arith.sitofp %28 : vector<32x128xi32> to vector<32x128xf32>
    %cst_10 = arith.constant dense<0.000000e+00> : vector<8x128xf32>
    %30 = tpu.matmul %0, %29, %cst_10 {dimension_numbers = #tpu.dot_dimension_numbers<[1], [0], [0], [1], [0, 0, 1, 1], [], []>} : vector<8x32xf32>, vector<32x128xf32>, vector<8x128xf32> -> vector<8x128xf32>
    %cst_11 = arith.constant dense<0.000000e+00> : vector<8x128xf32>
    %31 = tpu.matmul %1, %23, %cst_11 {dimension_numbers = #tpu.dot_dimension_numbers<[1], [0], [0], [1], [0, 0, 1, 1], [], []>} : vector<8x8xf32>, vector<8x128xf32>, vector<8x128xf32> -> vector<8x128xf32>
    %32 = arith.addf %30, %31 : vector<8x128xf32>
    %33 = math.tanh %32 : vector<8x128xf32>
    %c3_i32 = arith.constant 3 : i32
    %34 = arith.index_cast %c3_i32 : i32 to index
    %c0_12 = arith.constant 0 : index
    %35 = vector.load %arg1[%34, %c0_12] : memref<8x128xi32, #tpu.memory_space<vmem>>, vector<1x128xi32>
    %36 = vector.broadcast %35 : vector<1x128xi32> to vector<32x128xi32>
    %37 = arith.cmpi eq, %2, %36 : vector<32x128xi32>
    %38 = arith.extui %37 : vector<32x128xi1> to vector<32x128xi32>
    %39 = arith.sitofp %38 : vector<32x128xi32> to vector<32x128xf32>
    %cst_13 = arith.constant dense<0.000000e+00> : vector<8x128xf32>
    %40 = tpu.matmul %0, %39, %cst_13 {dimension_numbers = #tpu.dot_dimension_numbers<[1], [0], [0], [1], [0, 0, 1, 1], [], []>} : vector<8x32xf32>, vector<32x128xf32>, vector<8x128xf32> -> vector<8x128xf32>
    %cst_14 = arith.constant dense<0.000000e+00> : vector<8x128xf32>
    %41 = tpu.matmul %1, %33, %cst_14 {dimension_numbers = #tpu.dot_dimension_numbers<[1], [0], [0], [1], [0, 0, 1, 1], [], []>} : vector<8x8xf32>, vector<8x128xf32>, vector<8x128xf32> -> vector<8x128xf32>
    %42 = arith.addf %40, %41 : vector<8x128xf32>
    %43 = math.tanh %42 : vector<8x128xf32>
    %c4_i32 = arith.constant 4 : i32
    %44 = arith.index_cast %c4_i32 : i32 to index
    %c0_15 = arith.constant 0 : index
    %45 = vector.load %arg1[%44, %c0_15] : memref<8x128xi32, #tpu.memory_space<vmem>>, vector<1x128xi32>
    %46 = vector.broadcast %45 : vector<1x128xi32> to vector<32x128xi32>
    %47 = arith.cmpi eq, %2, %46 : vector<32x128xi32>
    %48 = arith.extui %47 : vector<32x128xi1> to vector<32x128xi32>
    %49 = arith.sitofp %48 : vector<32x128xi32> to vector<32x128xf32>
    %cst_16 = arith.constant dense<0.000000e+00> : vector<8x128xf32>
    %50 = tpu.matmul %0, %49, %cst_16 {dimension_numbers = #tpu.dot_dimension_numbers<[1], [0], [0], [1], [0, 0, 1, 1], [], []>} : vector<8x32xf32>, vector<32x128xf32>, vector<8x128xf32> -> vector<8x128xf32>
    %cst_17 = arith.constant dense<0.000000e+00> : vector<8x128xf32>
    %51 = tpu.matmul %1, %43, %cst_17 {dimension_numbers = #tpu.dot_dimension_numbers<[1], [0], [0], [1], [0, 0, 1, 1], [], []>} : vector<8x8xf32>, vector<8x128xf32>, vector<8x128xf32> -> vector<8x128xf32>
    %52 = arith.addf %50, %51 : vector<8x128xf32>
    %53 = math.tanh %52 : vector<8x128xf32>
    %c5_i32 = arith.constant 5 : i32
    %54 = arith.index_cast %c5_i32 : i32 to index
    %c0_18 = arith.constant 0 : index
    %55 = vector.load %arg1[%54, %c0_18] : memref<8x128xi32, #tpu.memory_space<vmem>>, vector<1x128xi32>
    %56 = vector.broadcast %55 : vector<1x128xi32> to vector<32x128xi32>
    %57 = arith.cmpi eq, %2, %56 : vector<32x128xi32>
    %58 = arith.extui %57 : vector<32x128xi1> to vector<32x128xi32>
    %59 = arith.sitofp %58 : vector<32x128xi32> to vector<32x128xf32>
    %cst_19 = arith.constant dense<0.000000e+00> : vector<8x128xf32>
    %60 = tpu.matmul %0, %59, %cst_19 {dimension_numbers = #tpu.dot_dimension_numbers<[1], [0], [0], [1], [0, 0, 1, 1], [], []>} : vector<8x32xf32>, vector<32x128xf32>, vector<8x128xf32> -> vector<8x128xf32>
    %cst_20 = arith.constant dense<0.000000e+00> : vector<8x128xf32>
    %61 = tpu.matmul %1, %53, %cst_20 {dimension_numbers = #tpu.dot_dimension_numbers<[1], [0], [0], [1], [0, 0, 1, 1], [], []>} : vector<8x8xf32>, vector<8x128xf32>, vector<8x128xf32> -> vector<8x128xf32>
    %62 = arith.addf %60, %61 : vector<8x128xf32>
    %63 = math.tanh %62 : vector<8x128xf32>
    %c6_i32 = arith.constant 6 : i32
    %64 = arith.index_cast %c6_i32 : i32 to index
    %c0_21 = arith.constant 0 : index
    %65 = vector.load %arg1[%64, %c0_21] : memref<8x128xi32, #tpu.memory_space<vmem>>, vector<1x128xi32>
    %66 = vector.broadcast %65 : vector<1x128xi32> to vector<32x128xi32>
    %67 = arith.cmpi eq, %2, %66 : vector<32x128xi32>
    %68 = arith.extui %67 : vector<32x128xi1> to vector<32x128xi32>
    %69 = arith.sitofp %68 : vector<32x128xi32> to vector<32x128xf32>
    %cst_22 = arith.constant dense<0.000000e+00> : vector<8x128xf32>
    %70 = tpu.matmul %0, %69, %cst_22 {dimension_numbers = #tpu.dot_dimension_numbers<[1], [0], [0], [1], [0, 0, 1, 1], [], []>} : vector<8x32xf32>, vector<32x128xf32>, vector<8x128xf32> -> vector<8x128xf32>
    %cst_23 = arith.constant dense<0.000000e+00> : vector<8x128xf32>
    %71 = tpu.matmul %1, %63, %cst_23 {dimension_numbers = #tpu.dot_dimension_numbers<[1], [0], [0], [1], [0, 0, 1, 1], [], []>} : vector<8x8xf32>, vector<8x128xf32>, vector<8x128xf32> -> vector<8x128xf32>
    %72 = arith.addf %70, %71 : vector<8x128xf32>
    %73 = math.tanh %72 : vector<8x128xf32>
    %c7_i32 = arith.constant 7 : i32
    %74 = arith.index_cast %c7_i32 : i32 to index
    %c0_24 = arith.constant 0 : index
    %75 = vector.load %arg1[%74, %c0_24] : memref<8x128xi32, #tpu.memory_space<vmem>>, vector<1x128xi32>
    %76 = vector.broadcast %75 : vector<1x128xi32> to vector<32x128xi32>
    %77 = arith.cmpi eq, %2, %76 : vector<32x128xi32>
    %78 = arith.extui %77 : vector<32x128xi1> to vector<32x128xi32>
    %79 = arith.sitofp %78 : vector<32x128xi32> to vector<32x128xf32>
    %cst_25 = arith.constant dense<0.000000e+00> : vector<8x128xf32>
    %80 = tpu.matmul %0, %79, %cst_25 {dimension_numbers = #tpu.dot_dimension_numbers<[1], [0], [0], [1], [0, 0, 1, 1], [], []>} : vector<8x32xf32>, vector<32x128xf32>, vector<8x128xf32> -> vector<8x128xf32>
    %cst_26 = arith.constant dense<0.000000e+00> : vector<8x128xf32>
    %81 = tpu.matmul %1, %73, %cst_26 {dimension_numbers = #tpu.dot_dimension_numbers<[1], [0], [0], [1], [0, 0, 1, 1], [], []>} : vector<8x8xf32>, vector<8x128xf32>, vector<8x128xf32> -> vector<8x128xf32>
    %82 = arith.addf %80, %81 : vector<8x128xf32>
    %83 = math.tanh %82 : vector<8x128xf32>
    %c8_i32 = arith.constant 8 : i32
    %c0_27 = arith.constant 0 : index
    %c0_28 = arith.constant 0 : index
    %84 = vector.load %arg4[%c0_27, %c0_28] : memref<8x1xf32, #tpu.memory_space<vmem>>, vector<8x1xf32>
    %85 = vector.broadcast %84 : vector<8x1xf32> to vector<8x128xf32>
    %86 = arith.mulf %83, %85 : vector<8x128xf32>
    %cst_29 = arith.constant dense<0.000000e+00> : vector<128xf32>
    %87 = vector.multi_reduction <add>, %86, %cst_29 [0] : vector<8x128xf32> to vector<128xf32>
    %88 = vector.shape_cast %87 : vector<128xf32> to vector<1x128xf32>
    %c0_30 = arith.constant 0 : index
    %c0_31 = arith.constant 0 : index
    %89 = vector.load %arg5[%c0_30, %c0_31] : memref<1x1xf32, #tpu.memory_space<vmem>>, vector<1x1xf32>
    %90 = vector.broadcast %89 : vector<1x1xf32> to vector<1x128xf32>
    %91 = arith.addf %88, %90 : vector<1x128xf32>
    %c0_32 = arith.constant 0 : index
    %c0_33 = arith.constant 0 : index
    %92 = vector.load %arg6[%c0_32, %c0_33] : memref<1x128xf32, #tpu.memory_space<vmem>>, vector<1x128xf32>
    tpu.vector_store %arg6[%c0_32, %c0_33], %91 {strides = array<i32>} : memref<1x128xf32, #tpu.memory_space<vmem>>, vector<1x128xf32>,
    return
  }
  func.func @transform_0(%arg0: i32) -> (i32, i32) {
    %c0_i32 = arith.constant 0 : i32
    %c0_i32_0 = arith.constant 0 : i32
    return %c0_i32, %arg0 : i32, i32
  }
  func.func @transform_1(%arg0: i32) -> (i32, i32) {
    %c0_i32 = arith.constant 0 : i32
    %c0_i32_0 = arith.constant 0 : i32
    %c0_i32_1 = arith.constant 0 : i32
    return %c0_i32, %c0_i32_0 : i32, i32
  }
  func.func @transform_2(%arg0: i32) -> (i32, i32) {
    %c0_i32 = arith.constant 0 : i32
    %c0_i32_0 = arith.constant 0 : i32
    %c0_i32_1 = arith.constant 0 : i32
    return %c0_i32, %c0_i32_0 : i32, i32
  }
  func.func @transform_3(%arg0: i32) -> (i32, i32) {
    %c0_i32 = arith.constant 0 : i32
    %c0_i32_0 = arith.constant 0 : i32
    %c0_i32_1 = arith.constant 0 : i32
    return %c0_i32, %c0_i32_0 : i32, i32
  }
  func.func @transform_4(%arg0: i32) -> (i32, i32) {
    %c0_i32 = arith.constant 0 : i32
    %c0_i32_0 = arith.constant 0 : i32
    %c0_i32_1 = arith.constant 0 : i32
    return %c0_i32, %c0_i32_0 : i32, i32
  }
  func.func @transform_5(%arg0: i32) -> (i32, i32) {
    %c0_i32 = arith.constant 0 : i32
    %c0_i32_0 = arith.constant 0 : i32
    return %c0_i32, %arg0 : i32, i32
  }
}

</mosaic_0001>

<llo_original>
// kernel: tpu_custom_call.1
$region0: #{tpu_custom_call.1}
  #allocation0 [shape = 'u32[]', space=smem, size = 0x4, offset = 0x4, fixed_abs, tag = 'smem constant byte address 0x4 - core index']
  #allocation1 [shape = 'u32[72,128]{1,0:T(1,128)}', space=vmem, size = 0x9000, scoped, tag = 'internal scratch']
  #allocation2 [shape = 'f32[1,1]{1,0:T(1,128)S(1)}', space=vmem, size = 0x200, scoped, tag = 'scoped memory for tpu_custom_call.1']
  %s0 = inlined_call_operand.vmem [shape: s32[8,128], index: 0, kind: input, shape index: {}]
  %s1 = inlined_call_operand.hbm [shape: f32[8,32], index: 1, kind: input, shape index: {}]
  %s2 = inlined_call_operand.hbm [shape: f32[8,8], index: 2, kind: input, shape index: {}]
  %s3 = inlined_call_operand.vmem [shape: f32[8,1], index: 3, kind: input, shape index: {}]
  %s4 = inlined_call_operand.<no memory space> [shape: f32[1,1], index: 4, kind: input, shape index: {}]
  %s5 = inlined_call_operand.hbm [shape: f32[1,128], index: 5, kind: output, shape index: {}]
  %s6 = sld [smem:[#allocation0]]
  $region38: #{tpu_custom_call.1} parent=0
    _
  %s8 = ssub.s32 1, %s6
  %s9 = scalar_select 0, %s8, %s6
  %v10 = vstv %s4
  %11 = vst [vmem:[#allocation2] sm:$0x1] %v10
  $region1: #{tpu_custom_call.1} parent=0
    #allocation3 [shape = 'u8[4096]{0}', space=vmem, size = 0x1000, scoped, tag = 'input window, operand 1, single buffered']
    #allocation4 [shape = 's32[1]{0}', space=sflag, size = 0x4, scoped, tag = 'scoped memory for tpu_custom_call.1']
    #allocation5 [shape = 's32[1]{0}', space=sflag, size = 0x4, scoped, tag = 'scoped memory for tpu_custom_call.1']
    #allocation6 [shape = 'u8[4096]{0}', space=vmem, size = 0x1000, scoped, tag = 'input window, operand 2, single buffered']
    #allocation7 [shape = 's32[1]{0}', space=sflag, size = 0x4, scoped, tag = 'scoped memory for tpu_custom_call.1']
    #allocation8 [shape = 'u8[512]{0}', space=vmem, size = 0x400, scoped, tag = 'output window, operand 0, single buffered']
    %12 = vsyncpa [#allocation4], 0
    %13 = vsyncpa [#allocation7], 0
    %14 = vsyncpa [#allocation5], 0
    // Predicated region
    $region2: #{tpu_custom_call.1} parent=1 // pred_check
      _
    $region3: #{tpu_custom_call.1} parent=1 // pred_check_branch
      %16 = sbr.rel (0) target = $region5
    $region4: #{tpu_custom_call.1} parent=1 // pred_region
      _
    $region5: #{tpu_custom_call.1} parent=1 // pred_fallthru
      _
    // Predicated region
    $region6: #{tpu_custom_call.1} parent=1 // pred_check
      _
    $region7: #{tpu_custom_call.1} parent=1 // pred_check_branch
      %18 = sbr.rel (0) target = $region9
    $region8: #{tpu_custom_call.1} parent=1 // pred_region
      %20 = vsyncadd [#allocation4], 0
      %s22 = sshll.u32 %s1, 4
      %s23 = int_to_ptr.hbm [resolvable:$true] %s22
      %s24 = sshll.u32 [#allocation3], 4
      %s25 = int_to_ptr.vmem [resolvable:$true] %s24
      %27 = dma.hbm_to_vmem [thread:$0]  %s23, 128, %s25, [#allocation4]
    $region9: #{tpu_custom_call.1} parent=1 // pred_fallthru
      _
    // Predicated region
    $region10: #{tpu_custom_call.1} parent=1 // pred_check
      _
    $region11: #{tpu_custom_call.1} parent=1 // pred_check_branch
      %29 = sbr.rel (0) target = $region13
    $region12: #{tpu_custom_call.1} parent=1 // pred_region
      %31 = vsyncadd [#allocation7], 0
      %s33 = sshll.u32 %s2, 4
      %s34 = int_to_ptr.hbm [resolvable:$true] %s33
      %s35 = sshll.u32 [#allocation6], 4
      %s36 = int_to_ptr.vmem [resolvable:$true] %s35
      %38 = dma.hbm_to_vmem [thread:$0]  %s34, 128, %s36, [#allocation7]
    $region13: #{tpu_custom_call.1} parent=1 // pred_fallthru
      _
    // Predicated region
    $region14: #{tpu_custom_call.1} parent=1 // pred_check
      _
    $region15: #{tpu_custom_call.1} parent=1 // pred_check_branch
      %40 = sbr.rel (0) target = $region17
    $region16: #{tpu_custom_call.1} parent=1 // pred_region
      _
    $region17: #{tpu_custom_call.1} parent=1 // pred_fallthru
      _
    // Predicated region
    $region18: #{tpu_custom_call.1} parent=1 // pred_check
      _
    $region19: #{tpu_custom_call.1} parent=1 // pred_check_branch
      %42 = sbr.rel (0) target = $region21
    $region20: #{tpu_custom_call.1} parent=1 // pred_region
      _
    $region21: #{tpu_custom_call.1} parent=1 // pred_fallthru
      _
    // Predicated region
    $region22: #{tpu_custom_call.1} parent=1 // pred_check
      _
    $region23: #{tpu_custom_call.1} parent=1 // pred_check_branch
      %44 = sbr.rel (0) target = $region25
    $region24: #{tpu_custom_call.1} parent=1 // pred_region
      %46 = dma.done [#allocation4], 128
    $region25: #{tpu_custom_call.1} parent=1 // pred_fallthru
      _
    // Predicated region
    $region26: #{tpu_custom_call.1} parent=1 // pred_check
      _
    $region27: #{tpu_custom_call.1} parent=1 // pred_check_branch
      %48 = sbr.rel (0) target = $region29
    $region28: #{tpu_custom_call.1} parent=1 // pred_region
      %50 = dma.done [#allocation7], 128
    $region29: #{tpu_custom_call.1} parent=1 // pred_fallthru
      _
    %v51 = vld [vmem:[#allocation3] sm:$0xff]
    %v52 = vld [vmem:[#allocation6] sm:$0xff]
    %v53 = vlaneseq
    %v54 = vshrl.u32 %v53, 7
    %v55 = vadd.s32 %v54, 8
    %v56 = vadd.s32 %v54, 16
    %v57 = vadd.s32 %v54, 24
    %v58 = vld [vmem:[%s0] sm:$0x1]
    %v59 = vperm.slane %v58, 0
    %vm60 = vcmp.eq.s32.totalorder %v54, %v59
    %vm61 = vcmp.eq.s32.totalorder %v55, %v59
    %vm62 = vcmp.eq.s32.totalorder %v56, %v59
    %vm63 = vcmp.eq.s32.totalorder %v57, %v59
    %v64 = vsel %vm60, 1, 0
    %v65 = vsel %vm61, 1, 0
    %v66 = vsel %vm62, 1, 0
    %v67 = vsel %vm63, 1, 0
    %v68 = vcvt.s32.f32 %v64
    %v69 = vcvt.s32.f32 %v65
    %v70 = vcvt.s32.f32 %v66
    %v71 = vcvt.s32.f32 %v67
    %vm72 = vcmask 64512
    %v74 = vsel %vm72, %v52, 0
    %76 = vmatpush.msra.mxu0 0.0
    %77 = vmatpush.msra.mxu0 0.0
    %78 = vmatpush.msra.mxu0 0.0
    %79 = vmatpush.msra.mxu0 0.0
    %80 = vmatpush.msra.mxu0 0.0
    %81 = vmatpush.msra.mxu0 0.0
    %82 = vmatpush.msra.mxu0 0.0
    %83 = vmatpush.msra.mxu0 0.0
    %84 = vmatpush.msra.mxu0 0.0
    %85 = vmatpush.msra.mxu0 0.0
    %86 = vmatpush.msra.mxu0 0.0
    %87 = vmatpush.msra.mxu0 0.0
    %88 = vmatpush.msra.mxu0 0.0
    %89 = vmatpush.msra.mxu0 0.0
    %90 = vmatpush.msra.mxu0 0.0
    %91 = vmatpush.msra.mxu0 0.0
    %92 = vmatmul.f32.gmra.mxu0 %v74
    %v93 = vpop.f32.mrf.mxu0
    %v94 = vadd.f32 0.0, %v93
    %95 = vdwg.mxu0
    %vm96 = vcmask 261120
    %v98 = vsel %vm96, %v51, 0
    %100 = vmatpush.msra.mxu0 0.0
    %101 = vmatpush.msra.mxu0 0.0
    %102 = vmatpush.msra.mxu0 0.0
    %103 = vmatpush.msra.mxu0 0.0
    %104 = vmatpush.msra.mxu0 0.0
    %105 = vmatpush.msra.mxu0 0.0
    %106 = vmatpush.msra.mxu0 0.0
    %107 = vmatpush.msra.mxu0 0.0
    %108 = vmatpush.msra.mxu0 0.0
    %109 = vmatpush.msra.mxu0 0.0
    %110 = vmatpush.msra.mxu0 0.0
    %111 = vmatpush.msra.mxu0 0.0
    %112 = vmatpush.msra.mxu0 %v71
    %113 = vmatpush.msra.mxu0 %v70
    %114 = vmatpush.msra.mxu0 %v69
    %115 = vmatpush.msra.mxu0 %v68
    %116 = vmatmul.f32.gmra.mxu0 %v98
    %v117 = vpop.f32.mrf.mxu0
    %v118 = vadd.f32 %v94, %v117
    %119 = vdwg.mxu0
    %v120 = vtanh.pop %v118
    %v121 = vld [vmem:[%s0 + $0x1] sm:$0x1]
    %v122 = vperm.slane %v121, 0
    %vm123 = vcmp.eq.s32.totalorder %v54, %v122
    %vm124 = vcmp.eq.s32.totalorder %v55, %v122
    %vm125 = vcmp.eq.s32.totalorder %v56, %v122
    %vm126 = vcmp.eq.s32.totalorder %v57, %v122
    %v127 = vsel %vm123, 1, 0
    %v128 = vsel %vm124, 1, 0
    %v129 = vsel %vm125, 1, 0
    %v130 = vsel %vm126, 1, 0
    %v131 = vcvt.s32.f32 %v127
    %v132 = vcvt.s32.f32 %v128
    %v133 = vcvt.s32.f32 %v129
    %v134 = vcvt.s32.f32 %v130
    %135 = vmatpush.msra.mxu0 0.0
    %136 = vmatpush.msra.mxu0 0.0
    %137 = vmatpush.msra.mxu0 0.0
    %138 = vmatpush.msra.mxu0 0.0
    %139 = vmatpush.msra.mxu0 0.0
    %140 = vmatpush.msra.mxu0 0.0
    %141 = vmatpush.msra.mxu0 0.0
    %142 = vmatpush.msra.mxu0 0.0
    %143 = vmatpush.msra.mxu0 0.0
    %144 = vmatpush.msra.mxu0 0.0
    %145 = vmatpush.msra.mxu0 0.0
    %146 = vmatpush.msra.mxu0 0.0
    %147 = vmatpush.msra.mxu0 0.0
    %148 = vmatpush.msra.mxu0 0.0
    %149 = vmatpush.msra.mxu0 0.0
    %150 = vmatpush.msra.mxu0 %v120
    %151 = vmatmul.f32.gmra.mxu0 %v74
    %v152 = vpop.f32.mrf.mxu0
    %v153 = vadd.f32 0.0, %v152
    %154 = vdwg.mxu0
    %155 = vmatpush.msra.mxu0 0.0
    %156 = vmatpush.msra.mxu0 0.0
    %157 = vmatpush.msra.mxu0 0.0
    %158 = vmatpush.msra.mxu0 0.0
    %159 = vmatpush.msra.mxu0 0.0
    %160 = vmatpush.msra.mxu0 0.0
    %161 = vmatpush.msra.mxu0 0.0
    %162 = vmatpush.msra.mxu0 0.0
    %163 = vmatpush.msra.mxu0 0.0
    %164 = vmatpush.msra.mxu0 0.0
    %165 = vmatpush.msra.mxu0 0.0
    %166 = vmatpush.msra.mxu0 0.0
    %167 = vmatpush.msra.mxu0 %v134
    %168 = vmatpush.msra.mxu0 %v133
    %169 = vmatpush.msra.mxu0 %v132
    %170 = vmatpush.msra.mxu0 %v131
    %171 = vmatmul.f32.gmra.mxu0 %v98
    %v172 = vpop.f32.mrf.mxu0
    %v173 = vadd.f32 %v153, %v172
    %174 = vdwg.mxu0
    %v175 = vtanh.pop %v173
    %v176 = vld [vmem:[%s0 + $0x2] sm:$0x1]
    %v177 = vperm.slane %v176, 0
    %vm178 = vcmp.eq.s32.totalorder %v54, %v177
    %vm179 = vcmp.eq.s32.totalorder %v55, %v177
    %vm180 = vcmp.eq.s32.totalorder %v56, %v177
    %vm181 = vcmp.eq.s32.totalorder %v57, %v177
    %v182 = vsel %vm178, 1, 0
    %v183 = vsel %vm179, 1, 0
    %v184 = vsel %vm180, 1, 0
    %v185 = vsel %vm181, 1, 0
    %v186 = vcvt.s32.f32 %v182
    %v187 = vcvt.s32.f32 %v183
    %v188 = vcvt.s32.f32 %v184
    %v189 = vcvt.s32.f32 %v185
    %190 = vmatpush.msra.mxu0 0.0
    %191 = vmatpush.msra.mxu0 0.0
    %192 = vmatpush.msra.mxu0 0.0
    %193 = vmatpush.msra.mxu0 0.0
    %194 = vmatpush.msra.mxu0 0.0
    %195 = vmatpush.msra.mxu0 0.0
    %196 = vmatpush.msra.mxu0 0.0
    %197 = vmatpush.msra.mxu0 0.0
    %198 = vmatpush.msra.mxu0 0.0
    %199 = vmatpush.msra.mxu0 0.0
    %200 = vmatpush.msra.mxu0 0.0
    %201 = vmatpush.msra.mxu0 0.0
    %202 = vmatpush.msra.mxu0 0.0
    %203 = vmatpush.msra.mxu0 0.0
    %204 = vmatpush.msra.mxu0 0.0
    %205 = vmatpush.msra.mxu0 %v175
    %206 = vmatmul.f32.gmra.mxu0 %v74
    %v207 = vpop.f32.mrf.mxu0
    %v208 = vadd.f32 0.0, %v207
    %209 = vdwg.mxu0
    %210 = vmatpush.msra.mxu0 0.0
    %211 = vmatpush.msra.mxu0 0.0
    %212 = vmatpush.msra.mxu0 0.0
    %213 = vmatpush.msra.mxu0 0.0
    %214 = vmatpush.msra.mxu0 0.0
    %215 = vmatpush.msra.mxu0 0.0
    %216 = vmatpush.msra.mxu0 0.0
    %217 = vmatpush.msra.mxu0 0.0
    %218 = vmatpush.msra.mxu0 0.0
    %219 = vmatpush.msra.mxu0 0.0
    %220 = vmatpush.msra.mxu0 0.0
    %221 = vmatpush.msra.mxu0 0.0
    %222 = vmatpush.msra.mxu0 %v189
    %223 = vmatpush.msra.mxu0 %v188
    %224 = vmatpush.msra.mxu0 %v187
    %225 = vmatpush.msra.mxu0 %v186
    %226 = vmatmul.f32.gmra.mxu0 %v98
    %v227 = vpop.f32.mrf.mxu0
    %v228 = vadd.f32 %v208, %v227
    %229 = vdwg.mxu0
    %v230 = vtanh.pop %v228
    %v231 = vld [vmem:[%s0 + $0x3] sm:$0x1]
    %v232 = vperm.slane %v231, 0
    %vm233 = vcmp.eq.s32.totalorder %v54, %v232
    %vm234 = vcmp.eq.s32.totalorder %v55, %v232
    %vm235 = vcmp.eq.s32.totalorder %v56, %v232
    %vm236 = vcmp.eq.s32.totalorder %v57, %v232
    %v237 = vsel %vm233, 1, 0
    %v238 = vsel %vm234, 1, 0
    %v239 = vsel %vm235, 1, 0
    %v240 = vsel %vm236, 1, 0
    %v241 = vcvt.s32.f32 %v237
    %v242 = vcvt.s32.f32 %v238
    %v243 = vcvt.s32.f32 %v239
    %v244 = vcvt.s32.f32 %v240
    %245 = vmatpush.msra.mxu0 0.0
    %246 = vmatpush.msra.mxu0 0.0
    %247 = vmatpush.msra.mxu0 0.0
    %248 = vmatpush.msra.mxu0 0.0
    %249 = vmatpush.msra.mxu0 0.0
    %250 = vmatpush.msra.mxu0 0.0
    %251 = vmatpush.msra.mxu0 0.0
    %252 = vmatpush.msra.mxu0 0.0
    %253 = vmatpush.msra.mxu0 0.0
    %254 = vmatpush.msra.mxu0 0.0
    %255 = vmatpush.msra.mxu0 0.0
    %256 = vmatpush.msra.mxu0 0.0
    %257 = vmatpush.msra.mxu0 0.0
    %258 = vmatpush.msra.mxu0 0.0
    %259 = vmatpush.msra.mxu0 0.0
    %260 = vmatpush.msra.mxu0 %v230
    %261 = vmatmul.f32.gmra.mxu0 %v74
    %v262 = vpop.f32.mrf.mxu0
    %v263 = vadd.f32 0.0, %v262
    %264 = vdwg.mxu0
    %265 = vmatpush.msra.mxu0 0.0
    %266 = vmatpush.msra.mxu0 0.0
    %267 = vmatpush.msra.mxu0 0.0
    %268 = vmatpush.msra.mxu0 0.0
    %269 = vmatpush.msra.mxu0 0.0
    %270 = vmatpush.msra.mxu0 0.0
    %271 = vmatpush.msra.mxu0 0.0
    %272 = vmatpush.msra.mxu0 0.0
    %273 = vmatpush.msra.mxu0 0.0
    %274 = vmatpush.msra.mxu0 0.0
    %275 = vmatpush.msra.mxu0 0.0
    %276 = vmatpush.msra.mxu0 0.0
    %277 = vmatpush.msra.mxu0 %v244
    %278 = vmatpush.msra.mxu0 %v243
    %279 = vmatpush.msra.mxu0 %v242
    %280 = vmatpush.msra.mxu0 %v241
    %281 = vmatmul.f32.gmra.mxu0 %v98
    %v282 = vpop.f32.mrf.mxu0
    %v283 = vadd.f32 %v263, %v282
    %284 = vdwg.mxu0
    %v285 = vtanh.pop %v283
    %v286 = vld [vmem:[%s0 + $0x4] sm:$0x1]
    %v287 = vperm.slane %v286, 0
    %vm288 = vcmp.eq.s32.totalorder %v54, %v287
    %vm289 = vcmp.eq.s32.totalorder %v55, %v287
    %vm290 = vcmp.eq.s32.totalorder %v56, %v287
    %vm291 = vcmp.eq.s32.totalorder %v57, %v287
    %v292 = vsel %vm288, 1, 0
    %v293 = vsel %vm289, 1, 0
    %v294 = vsel %vm290, 1, 0
    %v295 = vsel %vm291, 1, 0
    %v296 = vcvt.s32.f32 %v292
    %v297 = vcvt.s32.f32 %v293
    %v298 = vcvt.s32.f32 %v294
    %v299 = vcvt.s32.f32 %v295
    %300 = vmatpush.msra.mxu0 0.0
    %301 = vmatpush.msra.mxu0 0.0
    %302 = vmatpush.msra.mxu0 0.0
    %303 = vmatpush.msra.mxu0 0.0
    %304 = vmatpush.msra.mxu0 0.0
    %305 = vmatpush.msra.mxu0 0.0
    %306 = vmatpush.msra.mxu0 0.0
    %307 = vmatpush.msra.mxu0 0.0
    %308 = vmatpush.msra.mxu0 0.0
    %309 = vmatpush.msra.mxu0 0.0
    %310 = vmatpush.msra.mxu0 0.0
    %311 = vmatpush.msra.mxu0 0.0
    %312 = vmatpush.msra.mxu0 0.0
    %313 = vmatpush.msra.mxu0 0.0
    %314 = vmatpush.msra.mxu0 0.0
    %315 = vmatpush.msra.mxu0 %v285
    %316 = vmatmul.f32.gmra.mxu0 %v74
    %v317 = vpop.f32.mrf.mxu0
    %v318 = vadd.f32 0.0, %v317
    %319 = vdwg.mxu0
    %320 = vmatpush.msra.mxu0 0.0
    %321 = vmatpush.msra.mxu0 0.0
    %322 = vmatpush.msra.mxu0 0.0
    %323 = vmatpush.msra.mxu0 0.0
    %324 = vmatpush.msra.mxu0 0.0
    %325 = vmatpush.msra.mxu0 0.0
    %326 = vmatpush.msra.mxu0 0.0
    %327 = vmatpush.msra.mxu0 0.0
    %328 = vmatpush.msra.mxu0 0.0
    %329 = vmatpush.msra.mxu0 0.0
    %330 = vmatpush.msra.mxu0 0.0
    %331 = vmatpush.msra.mxu0 0.0
    %332 = vmatpush.msra.mxu0 %v299
    %333 = vmatpush.msra.mxu0 %v298
    %334 = vmatpush.msra.mxu0 %v297
    %335 = vmatpush.msra.mxu0 %v296
    %336 = vmatmul.f32.gmra.mxu0 %v98
    %v337 = vpop.f32.mrf.mxu0
    %v338 = vadd.f32 %v318, %v337
    %339 = vdwg.mxu0
    %v340 = vtanh.pop %v338
    %v341 = vld [vmem:[%s0 + $0x5] sm:$0x1]
    %v342 = vperm.slane %v341, 0
    %vm343 = vcmp.eq.s32.totalorder %v54, %v342
    %vm344 = vcmp.eq.s32.totalorder %v55, %v342
    %vm345 = vcmp.eq.s32.totalorder %v56, %v342
    %vm346 = vcmp.eq.s32.totalorder %v57, %v342
    %v347 = vsel %vm343, 1, 0
    %v348 = vsel %vm344, 1, 0
    %v349 = vsel %vm345, 1, 0
    %v350 = vsel %vm346, 1, 0
    %v351 = vcvt.s32.f32 %v347
    %v352 = vcvt.s32.f32 %v348
    %v353 = vcvt.s32.f32 %v349
    %v354 = vcvt.s32.f32 %v350
    %355 = vmatpush.msra.mxu0 0.0
    %356 = vmatpush.msra.mxu0 0.0
    %357 = vmatpush.msra.mxu0 0.0
    %358 = vmatpush.msra.mxu0 0.0
    %359 = vmatpush.msra.mxu0 0.0
    %360 = vmatpush.msra.mxu0 0.0
    %361 = vmatpush.msra.mxu0 0.0
    %362 = vmatpush.msra.mxu0 0.0
    %363 = vmatpush.msra.mxu0 0.0
    %364 = vmatpush.msra.mxu0 0.0
    %365 = vmatpush.msra.mxu0 0.0
    %366 = vmatpush.msra.mxu0 0.0
    %367 = vmatpush.msra.mxu0 0.0
    %368 = vmatpush.msra.mxu0 0.0
    %369 = vmatpush.msra.mxu0 0.0
    %370 = vmatpush.msra.mxu0 %v340
    %371 = vmatmul.f32.gmra.mxu0 %v74
    %v372 = vpop.f32.mrf.mxu0
    %v373 = vadd.f32 0.0, %v372
    %374 = vdwg.mxu0
    %375 = vmatpush.msra.mxu0 0.0
    %376 = vmatpush.msra.mxu0 0.0
    %377 = vmatpush.msra.mxu0 0.0
    %378 = vmatpush.msra.mxu0 0.0
    %379 = vmatpush.msra.mxu0 0.0
    %380 = vmatpush.msra.mxu0 0.0
    %381 = vmatpush.msra.mxu0 0.0
    %382 = vmatpush.msra.mxu0 0.0
    %383 = vmatpush.msra.mxu0 0.0
    %384 = vmatpush.msra.mxu0 0.0
    %385 = vmatpush.msra.mxu0 0.0
    %386 = vmatpush.msra.mxu0 0.0
    %387 = vmatpush.msra.mxu0 %v354
    %388 = vmatpush.msra.mxu0 %v353
    %389 = vmatpush.msra.mxu0 %v352
    %390 = vmatpush.msra.mxu0 %v351
    %391 = vmatmul.f32.gmra.mxu0 %v98
    %v392 = vpop.f32.mrf.mxu0
    %v393 = vadd.f32 %v373, %v392
    %394 = vdwg.mxu0
    %v395 = vtanh.pop %v393
    %v396 = vld [vmem:[%s0 + $0x6] sm:$0x1]
    %v397 = vperm.slane %v396, 0
    %vm398 = vcmp.eq.s32.totalorder %v54, %v397
    %vm399 = vcmp.eq.s32.totalorder %v55, %v397
    %vm400 = vcmp.eq.s32.totalorder %v56, %v397
    %vm401 = vcmp.eq.s32.totalorder %v57, %v397
    %v402 = vsel %vm398, 1, 0
    %v403 = vsel %vm399, 1, 0
    %v404 = vsel %vm400, 1, 0
    %v405 = vsel %vm401, 1, 0
    %v406 = vcvt.s32.f32 %v402
    %v407 = vcvt.s32.f32 %v403
    %v408 = vcvt.s32.f32 %v404
    %v409 = vcvt.s32.f32 %v405
    %410 = vmatpush.msra.mxu0 0.0
    %411 = vmatpush.msra.mxu0 0.0
    %412 = vmatpush.msra.mxu0 0.0
    %413 = vmatpush.msra.mxu0 0.0
    %414 = vmatpush.msra.mxu0 0.0
    %415 = vmatpush.msra.mxu0 0.0
    %416 = vmatpush.msra.mxu0 0.0
    %417 = vmatpush.msra.mxu0 0.0
    %418 = vmatpush.msra.mxu0 0.0
    %419 = vmatpush.msra.mxu0 0.0
    %420 = vmatpush.msra.mxu0 0.0
    %421 = vmatpush.msra.mxu0 0.0
    %422 = vmatpush.msra.mxu0 0.0
    %423 = vmatpush.msra.mxu0 0.0
    %424 = vmatpush.msra.mxu0 0.0
    %425 = vmatpush.msra.mxu0 %v395
    %426 = vmatmul.f32.gmra.mxu0 %v74
    %v427 = vpop.f32.mrf.mxu0
    %v428 = vadd.f32 0.0, %v427
    %429 = vdwg.mxu0
    %430 = vmatpush.msra.mxu0 0.0
    %431 = vmatpush.msra.mxu0 0.0
    %432 = vmatpush.msra.mxu0 0.0
    %433 = vmatpush.msra.mxu0 0.0
    %434 = vmatpush.msra.mxu0 0.0
    %435 = vmatpush.msra.mxu0 0.0
    %436 = vmatpush.msra.mxu0 0.0
    %437 = vmatpush.msra.mxu0 0.0
    %438 = vmatpush.msra.mxu0 0.0
    %439 = vmatpush.msra.mxu0 0.0
    %440 = vmatpush.msra.mxu0 0.0
    %441 = vmatpush.msra.mxu0 0.0
    %442 = vmatpush.msra.mxu0 %v409
    %443 = vmatpush.msra.mxu0 %v408
    %444 = vmatpush.msra.mxu0 %v407
    %445 = vmatpush.msra.mxu0 %v406
    %446 = vmatmul.f32.gmra.mxu0 %v98
    %v447 = vpop.f32.mrf.mxu0
    %v448 = vadd.f32 %v428, %v447
    %449 = vdwg.mxu0
    %v450 = vtanh.pop %v448
    %v451 = vld [vmem:[%s0 + $0x7] sm:$0x1]
    %v452 = vperm.slane %v451, 0
    %vm453 = vcmp.eq.s32.totalorder %v54, %v452
    %vm454 = vcmp.eq.s32.totalorder %v55, %v452
    %vm455 = vcmp.eq.s32.totalorder %v56, %v452
    %vm456 = vcmp.eq.s32.totalorder %v57, %v452
    %v457 = vsel %vm453, 1, 0
    %v458 = vsel %vm454, 1, 0
    %v459 = vsel %vm455, 1, 0
    %v460 = vsel %vm456, 1, 0
    %v461 = vcvt.s32.f32 %v457
    %v462 = vcvt.s32.f32 %v458
    %v463 = vcvt.s32.f32 %v459
    %v464 = vcvt.s32.f32 %v460
    %465 = vmatpush.msra.mxu0 0.0
    %466 = vmatpush.msra.mxu0 0.0
    %467 = vmatpush.msra.mxu0 0.0
    %468 = vmatpush.msra.mxu0 0.0
    %469 = vmatpush.msra.mxu0 0.0
    %470 = vmatpush.msra.mxu0 0.0
    %471 = vmatpush.msra.mxu0 0.0
    %472 = vmatpush.msra.mxu0 0.0
    %473 = vmatpush.msra.mxu0 0.0
    %474 = vmatpush.msra.mxu0 0.0
    %475 = vmatpush.msra.mxu0 0.0
    %476 = vmatpush.msra.mxu0 0.0
    %477 = vmatpush.msra.mxu0 0.0
    %478 = vmatpush.msra.mxu0 0.0
    %479 = vmatpush.msra.mxu0 0.0
    %480 = vmatpush.msra.mxu0 %v450
    %481 = vmatmul.f32.gmra.mxu0 %v74
    %v482 = vpop.f32.mrf.mxu0
    %v483 = vadd.f32 0.0, %v482
    %484 = vdwg.mxu0
    %485 = vmatpush.msra.mxu0 0.0
    %486 = vmatpush.msra.mxu0 0.0
    %487 = vmatpush.msra.mxu0 0.0
    %488 = vmatpush.msra.mxu0 0.0
    %489 = vmatpush.msra.mxu0 0.0
    %490 = vmatpush.msra.mxu0 0.0
    %491 = vmatpush.msra.mxu0 0.0
    %492 = vmatpush.msra.mxu0 0.0
    %493 = vmatpush.msra.mxu0 0.0
    %494 = vmatpush.msra.mxu0 0.0
    %495 = vmatpush.msra.mxu0 0.0
    %496 = vmatpush.msra.mxu0 0.0
    %497 = vmatpush.msra.mxu0 %v464
    %498 = vmatpush.msra.mxu0 %v463
    %499 = vmatpush.msra.mxu0 %v462
    %500 = vmatpush.msra.mxu0 %v461
    %501 = vmatmul.f32.gmra.mxu0 %v98
    %v502 = vpop.f32.mrf.mxu0
    %v503 = vadd.f32 %v483, %v502
    %504 = vdwg.mxu0
    %v505 = vtanh.pop %v503
    %v506 = vld [vmem:[%s3] sm:$0xff]
    %508 = vset.pattern.permute.xlu0 0
    %509 = vperm.xlu0 %508, %v506
    %v510 = vpop.permute.xlu0 %509
    %v512 = vmul.f32 %v505, %v510
    %v513 = vrot.slane %v512, 4
    %v514 = vadd.f32 %v512, %v513
    %v515 = vrot.slane %v514, 2
    %v516 = vadd.f32 %v514, %v515
    %v517 = vrot.slane %v516, 1
    %v518 = vadd.f32 %v516, %v517
    %v519 = vld [vmem:[#allocation2] sm:$0x1]
    %521 = vset.pattern.permute.xlu0 0
    %522 = vperm.xlu0 %521, %v519
    %v523 = vpop.permute.xlu0 %522
    %v525 = vperm.slane %v523, 0
    %v526 = vadd.f32 %v518, %v525
    %527 = vst [vmem:[#allocation8] sm:$0x1] %v526
    // Predicated region
    $region30: #{tpu_custom_call.1} parent=1 // pred_check
      _
    $region31: #{tpu_custom_call.1} parent=1 // pred_check_branch
      %529 = sbr.rel (0) target = $region33
    $region32: #{tpu_custom_call.1} parent=1 // pred_region
      %531 = vsyncadd [#allocation5], 0
      %s533 = sshll.u32 [#allocation8], 4
      %s534 = int_to_ptr.vmem [resolvable:$true] %s533
      %s535 = sshll.u32 %s5, 4
      %s536 = int_to_ptr.hbm [resolvable:$true] %s535
      %538 = dma.vmem_to_hbm [thread:$0]  %s534, 16, %s536, [#allocation5]
    $region33: #{tpu_custom_call.1} parent=1 // pred_fallthru
      _
    // Predicated region
    $region34: #{tpu_custom_call.1} parent=1 // pred_check
      _
    $region35: #{tpu_custom_call.1} parent=1 // pred_check_branch
      %540 = sbr.rel (0) target = $region37
    $region36: #{tpu_custom_call.1} parent=1 // pred_region
      %542 = dma.done [#allocation5], 16
    $region37: #{tpu_custom_call.1} parent=1 // pred_fallthru
      _
    %543 = vsyncpa [#allocation4], 1
    %544 = vsyncpa [#allocation7], 1
    %545 = vsyncpa [#allocation5], 1

</llo_original>
